<compile_context>
chip_gen: v5e
topology: v5e:2x2
jax: 0.10.0
libtpu: 0.0.40
codegen_flags: <defaults>
</compile_context>

<pallas_src>
import jax
import jax.numpy as jnp
from jax import lax
from jax.experimental import pallas as pl
from jax.experimental.pallas import tpu as pltpu


_VMEM_LIMIT_BYTES = 48 * 1024 * 1024       # safe on v5e/v6e (128 MiB) and v7x (64 MiB)
_BLOCK_BUDGET_BYTES = 12 * 1024 * 1024     # per-step (in+out) bytes; ~2x for double buffering


def _coarse_up_kernel(x_ref, e_ref, o_ref):
    # x_ref: (R, W)          block of rows of the (N*C*H, W) input view
    # e_ref: (W, S1*S2*W)    combined row+column zero-insertion selector (0/1 matrix)
    # o_ref: (R, S1*S2*W)    corresponding block of the flattened output view
    o_ref[...] = jnp.dot(
        x_ref[...],
        e_ref[...],
        preferred_element_type=jnp.float32,
        precision=lax.Precision.HIGHEST,   # bit-exact passthrough of x through the 0/1 selector
    ).astype(o_ref.dtype)


def _pick_block_rows(total_rows, bytes_per_row,
                     target_rows=1024,
                     block_budget_bytes=_BLOCK_BUDGET_BYTES):
    """Largest row-block that divides total_rows, is a multiple of 8 (sublane),
    fits the VMEM budget, and (when possible) leaves >= 2 grid steps so the
    'parallel' grid axis can shard across v7x's two TensorCores."""
    cap = min(target_rows, max(8, block_budget_bytes // max(1, bytes_per_row)))
    if total_rows >= 16:
        cap = min(cap, total_rows // 2)
    cap = min(cap, total_rows)
    for r in range(cap, 0, -1):
        if total_rows % r == 0 and r % 8 == 0:
            return r
    return total_rows  # ragged/tiny shapes: one full-extent block (always legal)


def coarse_up(x, S1, S2):
    """Zero-insertion upsampling by (S1, S2) of an NCHW tensor via Pallas.

    Note: the output store is fully lane-dense only when S1*S2*W >= 128; for smaller
    widths the store vregs are partially masked (unavoidable at this layout).
    """
    N, C, H, W = x.shape
    Ho, Wo = H * S1, W * S2
    n_out = S1 * S2 * W

    compute_dtype = jnp.bfloat16 if x.dtype == jnp.bfloat16 else jnp.float32

    # Combined zero-insertion selector: out2d[p, j*S2] = x2d[p, j], all other cols zero.
    # (Row zero-insertion comes for free because the (N*C*H, S1*S2*W) output view has the
    #  same HBM layout as (N, C, H*S1, W*S2).)
    E = (jnp.zeros((W, n_out), compute_dtype)
         .at[jnp.arange(W), jnp.arange(W) * S2].set(1))

    x2d = x.reshape(N * C * H, W)
    total_rows = N * C * H

    itemsize = jnp.dtype(x.dtype).itemsize
    bytes_per_row = (W + n_out) * itemsize
    R = _pick_block_rows(total_rows, bytes_per_row)
    grid = (total_rows // R,)

    out2d = pl.pallas_call(
        _coarse_up_kernel,
        out_shape=jax.ShapeDtypeStruct((total_rows, n_out), x.dtype),
        grid_spec=pltpu.PrefetchScalarGridSpec(
            num_scalar_prefetch=0,
            grid=grid,
            in_specs=[
                pl.BlockSpec((R, W), lambda i: (i, 0)),
                pl.BlockSpec((W, n_out), lambda i: (0, 0)),
            ],
            out_specs=pl.BlockSpec((R, n_out), lambda i: (i, 0)),
        ),
        compiler_params=pltpu.CompilerParams(
            dimension_semantics=("parallel",),
            vmem_limit_bytes=_VMEM_LIMIT_BYTES,
        ),
    )(x2d, E)

    return out2d.reshape(N, C, Ho, Wo)


def _coarse_up_ref(x, S1, S2):
    N, C, H, W = x.shape
    out = jnp.zeros((N, C, H, S1, W, S2), x.dtype)
    out = out.at[:, :, :, 0, :, 0].set(x)
    return out.reshape(N, C, H * S1, W * S2)


if __name__ == "__main__":
    # n1 = hipassF.shape[1] -> number of filters / upsampling factor; use a small value.
    n1 = 2
    S1, S2 = n1, n1

    key = jax.random.PRNGKey(0)
    x = jax.random.normal(key, (2, 4, 16, 16), dtype=jnp.float32)

    y = coarse_up(x, S1, S2)
    y = jax.block_until_ready(y)

    y_ref = _coarse_up_ref(x, S1, S2)
    assert y.shape == (2, 4, 16 * S1, 16 * S2), y.shape
    assert jnp.allclose(y, y_ref, atol=1e-6, rtol=1e-6)

    print("KERNEL_OK")
</pallas_src>

<mosaic_0001>
module attributes {stable_mosaic.version = 11 : i64} {
  func.func @_coarse_up_kernel(%arg0: i32, %arg1: memref<64x16xf32, #tpu.memory_space<vmem>>, %arg2: memref<16x64xf32, #tpu.memory_space<vmem>>, %arg3: memref<64x64xf32, #tpu.memory_space<vmem>>) attributes {dimension_semantics = [#tpu.dimension_semantics<parallel>], iteration_bounds = array<i64: 2>, scalar_prefetch = 0 : i64, scratch_operands = 0 : i64, tpu.core_type = #tpu.core_type<tc>, window_params = [{transform_indices = @transform_0, window_bounds = array<i64: 64, 16>}, {pipeline_mode = #tpu.pipeline_mode<synchronous>, transform_indices = @transform_1, window_bounds = array<i64: 16, 64>}, {transform_indices = @transform_2, window_bounds = array<i64: 64, 64>}]} {
    %c0 = arith.constant 0 : index
    %c0_0 = arith.constant 0 : index
    %0 = vector.load %arg1[%c0, %c0_0] : memref<64x16xf32, #tpu.memory_space<vmem>>, vector<64x16xf32>
    %c0_1 = arith.constant 0 : index
    %c0_2 = arith.constant 0 : index
    %1 = vector.load %arg2[%c0_1, %c0_2] : memref<16x64xf32, #tpu.memory_space<vmem>>, vector<16x64xf32>
    %cst = arith.constant dense<0.000000e+00> : vector<64x64xf32>
    %2 = tpu.matmul %0, %1, %cst {dimension_numbers = #tpu.dot_dimension_numbers<[1], [0], [0], [1], [0, 0, 1, 1], [], []>, precision = #tpu.contract_precision<fp32>} : vector<64x16xf32>, vector<16x64xf32>, vector<64x64xf32> -> vector<64x64xf32>
    %c0_3 = arith.constant 0 : index
    %c0_4 = arith.constant 0 : index
    %3 = vector.load %arg3[%c0_3, %c0_4] : memref<64x64xf32, #tpu.memory_space<vmem>>, vector<64x64xf32>
    tpu.vector_store %arg3[%c0_3, %c0_4], %2 {strides = array<i32>} : memref<64x64xf32, #tpu.memory_space<vmem>>, vector<64x64xf32>,
    return
  }
  func.func @transform_0(%arg0: i32) -> (i32, i32) {
    %c0_i32 = arith.constant 0 : i32
    %c0_i32_0 = arith.constant 0 : i32
    return %arg0, %c0_i32 : i32, i32
  }
  func.func @transform_1(%arg0: i32) -> (i32, i32) {
    %c0_i32 = arith.constant 0 : i32
    %c0_i32_0 = arith.constant 0 : i32
    %c0_i32_1 = arith.constant 0 : i32
    return %c0_i32, %c0_i32_0 : i32, i32
  }
  func.func @transform_2(%arg0: i32) -> (i32, i32) {
    %c0_i32 = arith.constant 0 : i32
    %c0_i32_0 = arith.constant 0 : i32
    return %arg0, %c0_i32 : i32, i32
  }
}

</mosaic_0001>

<llo_original>
// kernel: tpu_custom_call.1
$region0: #{tpu_custom_call.1}
  #allocation0 [shape = 'u32[]', space=smem, size = 0x4, offset = 0x4, fixed_abs, tag = 'smem constant byte address 0x4 - core index']
  #allocation1 [shape = 'u32[72,128]{1,0:T(1,128)}', space=vmem, size = 0x9000, scoped, tag = 'internal scratch']
  %s0 = inlined_call_operand.vmem [shape: f32[128,16], index: 0, kind: input, shape index: {}]
  %s1 = inlined_call_operand.vmem [shape: f32[16,64], index: 1, kind: input, shape index: {}]
  %s2 = inlined_call_operand.vmem [shape: f32[128,64], index: 2, kind: output, shape index: {}]
  %s3 = sld [smem:[#allocation0]]
  $region41: #{tpu_custom_call.1} parent=0
    _
  %s5 = ssub.s32 1, %s3
  %s6 = scalar_select 0, %s5, %s3
  loop: start=0, step=1, limit=4
  $region2: #{tpu_custom_call.1} parent=0 // loop_pre_header
    _
  $region3: #{tpu_custom_call.1} parent=0 // loop_header
    %s8 = sphi 0, %s12
    %p9 = scmp.ge.s32.totalorder %s8, 4
    %s18 = sphi 0, %s20
    %s21 = sphi 0, %s18
    %s22 = sphi 0, %s21
    %s38 = sphi 0, %s22
    %s42 = sphi 0, %s42
    %s44 = sphi 0, %s42
    %s45 = sphi 0, %s44
    %s59 = sphi 0, %s45
    %s65 = sphi 0, %s67
    %s68 = sphi 0, %s65
    %s69 = sphi 0, %s68
    %s85 = sphi 0, %s69
  $region4: #{tpu_custom_call.1} parent=0 // loop_header_branch
    %11 = sbr.rel (%p9) target = $region8
  $region5: #{tpu_custom_call.1} parent=0 // loop_body
    %s13 = ssub.s32 %s8, 1
    %s14 = ssub.s32 %s8, 2
    %s15 = sadd.s32 %s8, 1
    %s16 = ssub.s32 %s8, %s15
    %p17 = scmp.eq.s32.totalorder %s16, 0
    %s19 = sadd.s32 %s18, 1
    %s20 = scalar_select %p17, %s18, %s19
    %p23 = pneg %p17
    %p24 = scmp.eq.s32.totalorder %s8, 1
    %p25 = por %p23, %p24
    %p26 = scmp.ne.s32.totalorder %s18, %s21
    %p27 = scmp.eq.s32.totalorder %s8, 0
    %p28 = por %p26, %p27
    %p29 = scmp.ne.s32.totalorder %s18, %s21
    %p30 = scmp.eq.s32.totalorder %s13, 1
    %p31 = por %p29, %p30
    %p32 = scmp.ne.s32.totalorder %s21, %s22
    %p33 = scmp.eq.s32.totalorder %s13, 0
    %p34 = por %p32, %p33
    %p35 = scmp.ne.s32.totalorder %s21, %s22
    %p36 = scmp.eq.s32.totalorder %s14, 1
    %p37 = por %p35, %p36
    %p39 = scmp.ne.s32.totalorder %s22, %s38
    %p40 = scmp.eq.s32.totalorder %s14, 0
    %p41 = por %p39, %p40
    %s43 = sadd.s32 %s42, 1
    %p46 = scmp.eq.s32.totalorder %s8, 1
    %p47 = scmp.ne.s32.totalorder %s42, %s44
    %p48 = scmp.eq.s32.totalorder %s8, 0
    %p49 = por %p47, %p48
    %p50 = scmp.ne.s32.totalorder %s42, %s44
    %p51 = scmp.eq.s32.totalorder %s13, 1
    %p52 = por %p50, %p51
    %p53 = scmp.ne.s32.totalorder %s44, %s45
    %p54 = scmp.eq.s32.totalorder %s13, 0
    %p55 = por %p53, %p54
    %p56 = scmp.ne.s32.totalorder %s44, %s45
    %p57 = scmp.eq.s32.totalorder %s14, 1
    %p58 = por %p56, %p57
    %p60 = scmp.ne.s32.totalorder %s45, %s59
    %p61 = scmp.eq.s32.totalorder %s14, 0
    %p62 = por %p60, %p61
    %s63 = ssub.s32 %s8, %s15
    %p64 = scmp.eq.s32.totalorder %s63, 0
    %s66 = sadd.s32 %s65, 1
    %s67 = scalar_select %p64, %s65, %s66
    %p70 = pneg %p64
    %p71 = scmp.eq.s32.totalorder %s8, 1
    %p72 = por %p70, %p71
    %p73 = scmp.ne.s32.totalorder %s65, %s68
    %p74 = scmp.eq.s32.totalorder %s8, 0
    %p75 = por %p73, %p74
    %p76 = scmp.ne.s32.totalorder %s65, %s68
    %p77 = scmp.eq.s32.totalorder %s13, 1
    %p78 = por %p76, %p77
    %p79 = scmp.ne.s32.totalorder %s68, %s69
    %p80 = scmp.eq.s32.totalorder %s13, 0
    %p81 = por %p79, %p80
    %p82 = scmp.ne.s32.totalorder %s68, %s69
    %p83 = scmp.eq.s32.totalorder %s14, 1
    %p84 = por %p82, %p83
    %p86 = scmp.ne.s32.totalorder %s69, %s85
    %p87 = scmp.eq.s32.totalorder %s14, 0
    %p88 = por %p86, %p87
    %p89 = scmp.le.s32.totalorder 1, %s8
    %p90 = scmp.lt.s32.totalorder %s8, 3
    %p91 = pnand %p89, %p90
    %p92 = pneg %p91
    // Predicated region
    $region9: #{tpu_custom_call.1} parent=5 // pred_check
      _
    $region10: #{tpu_custom_call.1} parent=5 // pred_check_branch
      %94 = sbr.rel (%p91) target = $region12
    $region11: #{tpu_custom_call.1} parent=5 // pred_region
      %s95 = ssub.s32 %s8, 1
      // Predicated region
      $region13: #{tpu_custom_call.1} parent=11 // pred_check
        %p96 = pneg %p55
      $region14: #{tpu_custom_call.1} parent=11 // pred_check_branch
        %98 = sbr.rel (%p96) target = $region16
      $region15: #{tpu_custom_call.1} parent=11 // pred_region
        _
      $region16: #{tpu_custom_call.1} parent=11 // pred_fallthru
        _
    $region12: #{tpu_custom_call.1} parent=5 // pred_fallthru
      _
    %p99 = scmp.lt.s32.totalorder %s8, 2
    // Predicated region
    $region17: #{tpu_custom_call.1} parent=5 // pred_check
      %p100 = pneg %p99
    $region18: #{tpu_custom_call.1} parent=5 // pred_check_branch
      %102 = sbr.rel (%p100) target = $region20
    $region19: #{tpu_custom_call.1} parent=5 // pred_region
      // Predicated region
      $region21: #{tpu_custom_call.1} parent=19 // pred_check
        %p103 = pneg %p28
      $region22: #{tpu_custom_call.1} parent=19 // pred_check_branch
        %105 = sbr.rel (%p103) target = $region24
      $region23: #{tpu_custom_call.1} parent=19 // pred_region
        %s106 = smul.u32 8, %s8
        %p107 = scmp.lt.s32.totalorder %s106, 15
        %s108 = scalar_select %p107, %s106, 15
        %s109 = smul.addr %s108, 8
        %s110 = scalar_lea.vmem %s0, %s109
        %s111 = smul.u32 8, %s8
      $region24: #{tpu_custom_call.1} parent=19 // pred_fallthru
        _
    $region20: #{tpu_custom_call.1} parent=5 // pred_fallthru
      _
    %p112 = scmp.le.s32.totalorder 1, %s8
    %p113 = scmp.lt.s32.totalorder %s8, 3
    %p114 = pnand %p112, %p113
    %p115 = pneg %p114
    // Predicated region
    $region25: #{tpu_custom_call.1} parent=5 // pred_check
      _
    $region26: #{tpu_custom_call.1} parent=5 // pred_check_branch
      %117 = sbr.rel (%p114) target = $region28
    $region27: #{tpu_custom_call.1} parent=5 // pred_region
      %s118 = ssub.s32 %s8, 1
      %s119 = smul.u32 8, %s13
      %p120 = scmp.lt.s32.totalorder %s119, 15
      %s121 = scalar_select %p120, %s119, 15
      %s122 = smul.addr %s121, 8
      %s123 = scalar_lea.vmem %s0, %s122
      %p124 = pneg %p34
      %p125 = pneg %p31
      %p126 = pneg %p55
      %p127 = pneg %p52
      %p128 = pneg %p81
      %p129 = pneg %p78
      %s130 = smul.u32 8, %s13
      %p131 = scmp.lt.s32.totalorder %s130, 15
      %s132 = scalar_select %p131, %s130, 15
      %s133 = smul.addr %s132, 8
      %s134 = scalar_lea.vmem %s2, %s133
      %s135 = smul.u32 8, %s13
      %p136 = scmp.lt.s32.totalorder %s135, 15
      %s137 = scalar_select %p136, %s135, 15
      %s138 = smul.addr %s137, 8
      %s139 = scalar_lea.vmem %s0, %s138
      %s140 = smul.u32 8, %s13
      %s141 = smul.u32 8, %s13
      %p142 = scmp.lt.s32.totalorder %s141, 15
      %s143 = scalar_select %p142, %s141, 15
      %s144 = smul.addr %s143, 8
      %s145 = scalar_lea.vmem %s2, %s144
      %s146 = smul.u32 8, %s13
      %v147 = vld [vmem:[%s139] sm:$0xff]
      %v148 = vld [vmem:[%s139 + $0x8] sm:$0xff]
      %v149 = vld [vmem:[%s139 + $0x10] sm:$0xff]
      %v150 = vld [vmem:[%s139 + $0x18] sm:$0xff]
      %v151 = vld [vmem:[%s139 + $0x20] sm:$0xff]
      %v152 = vld [vmem:[%s139 + $0x28] sm:$0xff]
      %v153 = vld [vmem:[%s139 + $0x30] sm:$0xff]
      %v154 = vld [vmem:[%s139 + $0x38] sm:$0xff]
      %v155 = vld [vmem:[%s1] sm:$0xff]
      %v156 = vld [vmem:[%s1 + $0x8] sm:$0xff]
      %vm157 = vcmask 130048
      %v159 = vsel %vm157, %v147, 0
      %v162 = vsel %vm157, %v148, 0
      %v165 = vsel %vm157, %v149, 0
      %v168 = vsel %vm157, %v150, 0
      %v171 = vsel %vm157, %v151, 0
      %v174 = vsel %vm157, %v152, 0
      %v177 = vsel %vm157, %v153, 0
      %v180 = vsel %vm157, %v154, 0
      %182 = vmatpush.msra.mxu0 0.0
      %183 = vmatpush.msra.mxu0 0.0
      %184 = vmatpush.msra.mxu0 0.0
      %185 = vmatpush.msra.mxu0 0.0
      %186 = vmatpush.msra.mxu0 0.0
      %187 = vmatpush.msra.mxu0 0.0
      %188 = vmatpush.msra.mxu0 0.0
      %189 = vmatpush.msra.mxu0 0.0
      %190 = vmatpush.msra.mxu0 0.0
      %191 = vmatpush.msra.mxu0 0.0
      %192 = vmatpush.msra.mxu0 0.0
      %193 = vmatpush.msra.mxu0 0.0
      %194 = vmatpush.msra.mxu0 0.0
      %195 = vmatpush.msra.mxu0 0.0
      %v196 = vand.u32 %v156, 4294901760
      %197 = vmatpush.msra.mxu0 %v196
      %v198 = vand.u32 %v155, 4294901760
      %199 = vmatpush.msra.mxu0 %v198
      %v200 = vand.u32 %v159, 4294901760
      %v201 = vsub.f32 %v159, %v200
      %v202 = vand.u32 %v201, 4294901760
      %v203 = vsub.f32 %v201, %v202
      %v204 = vand.u32 %v203, 4294901760
      %205 = vmatmul.f32.gmra.mxu0 %v204
      %v206 = vpop.f32.mrf.mxu0
      %v207 = vadd.f32 0.0, %v206
      %v208 = vand.u32 %v162, 4294901760
      %v209 = vsub.f32 %v162, %v208
      %v210 = vand.u32 %v209, 4294901760
      %v211 = vsub.f32 %v209, %v210
      %v212 = vand.u32 %v211, 4294901760
      %213 = vmatmul.f32.gmra.mxu0 %v212
      %v214 = vpop.f32.mrf.mxu0
      %v215 = vadd.f32 0.0, %v214
      %v216 = vand.u32 %v165, 4294901760
      %v217 = vsub.f32 %v165, %v216
      %v218 = vand.u32 %v217, 4294901760
      %v219 = vsub.f32 %v217, %v218
      %v220 = vand.u32 %v219, 4294901760
      %221 = vmatmul.f32.gmra.mxu0 %v220
      %v222 = vpop.f32.mrf.mxu0
      %v223 = vadd.f32 0.0, %v222
      %v224 = vand.u32 %v168, 4294901760
      %v225 = vsub.f32 %v168, %v224
      %v226 = vand.u32 %v225, 4294901760
      %v227 = vsub.f32 %v225, %v226
      %v228 = vand.u32 %v227, 4294901760
      %229 = vmatmul.f32.gmra.mxu0 %v228
      %v230 = vpop.f32.mrf.mxu0
      %v231 = vadd.f32 0.0, %v230
      %v232 = vand.u32 %v171, 4294901760
      %v233 = vsub.f32 %v171, %v232
      %v234 = vand.u32 %v233, 4294901760
      %v235 = vsub.f32 %v233, %v234
      %v236 = vand.u32 %v235, 4294901760
      %237 = vmatmul.f32.gmra.mxu0 %v236
      %v238 = vpop.f32.mrf.mxu0
      %v239 = vadd.f32 0.0, %v238
      %v240 = vand.u32 %v174, 4294901760
      %v241 = vsub.f32 %v174, %v240
      %v242 = vand.u32 %v241, 4294901760
      %v243 = vsub.f32 %v241, %v242
      %v244 = vand.u32 %v243, 4294901760
      %245 = vmatmul.f32.gmra.mxu0 %v244
      %v246 = vpop.f32.mrf.mxu0
      %v247 = vadd.f32 0.0, %v246
      %v248 = vand.u32 %v177, 4294901760
      %v249 = vsub.f32 %v177, %v248
      %v250 = vand.u32 %v249, 4294901760
      %v251 = vsub.f32 %v249, %v250
      %v252 = vand.u32 %v251, 4294901760
      %253 = vmatmul.f32.gmra.mxu0 %v252
      %v254 = vpop.f32.mrf.mxu0
      %v255 = vadd.f32 0.0, %v254
      %v256 = vand.u32 %v180, 4294901760
      %v257 = vsub.f32 %v180, %v256
      %v258 = vand.u32 %v257, 4294901760
      %v259 = vsub.f32 %v257, %v258
      %v260 = vand.u32 %v259, 4294901760
      %261 = vmatmul.f32.gmra.mxu0 %v260
      %v262 = vpop.f32.mrf.mxu0
      %v263 = vadd.f32 0.0, %v262
      %264 = vdwg.mxu0
      %265 = vmatpush.msra.mxu0 0.0
      %266 = vmatpush.msra.mxu0 0.0
      %267 = vmatpush.msra.mxu0 0.0
      %268 = vmatpush.msra.mxu0 0.0
      %269 = vmatpush.msra.mxu0 0.0
      %270 = vmatpush.msra.mxu0 0.0
      %271 = vmatpush.msra.mxu0 0.0
      %272 = vmatpush.msra.mxu0 0.0
      %273 = vmatpush.msra.mxu0 0.0
      %274 = vmatpush.msra.mxu0 0.0
      %275 = vmatpush.msra.mxu0 0.0
      %276 = vmatpush.msra.mxu0 0.0
      %277 = vmatpush.msra.mxu0 0.0
      %278 = vmatpush.msra.mxu0 0.0
      %v279 = vand.u32 %v156, 4294901760
      %v280 = vsub.f32 %v156, %v279
      %v281 = vand.u32 %v280, 4294901760
      %v282 = vsub.f32 %v280, %v281
      %v283 = vand.u32 %v282, 4294901760
      %284 = vmatpush.msra.mxu0 %v283
      %v285 = vand.u32 %v155, 4294901760
      %v286 = vsub.f32 %v155, %v285
      %v287 = vand.u32 %v286, 4294901760
      %v288 = vsub.f32 %v286, %v287
      %v289 = vand.u32 %v288, 4294901760
      %290 = vmatpush.msra.mxu0 %v289
      %v291 = vand.u32 %v159, 4294901760
      %292 = vmatmul.f32.gmra.mxu0 %v291
      %v293 = vpop.f32.mrf.mxu0
      %v294 = vadd.f32 %v207, %v293
      %v295 = vand.u32 %v162, 4294901760
      %296 = vmatmul.f32.gmra.mxu0 %v295
      %v297 = vpop.f32.mrf.mxu0
      %v298 = vadd.f32 %v215, %v297
      %v299 = vand.u32 %v165, 4294901760
      %300 = vmatmul.f32.gmra.mxu0 %v299
      %v301 = vpop.f32.mrf.mxu0
      %v302 = vadd.f32 %v223, %v301
      %v303 = vand.u32 %v168, 4294901760
      %304 = vmatmul.f32.gmra.mxu0 %v303
      %v305 = vpop.f32.mrf.mxu0
      %v306 = vadd.f32 %v231, %v305
      %v307 = vand.u32 %v171, 4294901760
      %308 = vmatmul.f32.gmra.mxu0 %v307
      %v309 = vpop.f32.mrf.mxu0
      %v310 = vadd.f32 %v239, %v309
      %v311 = vand.u32 %v174, 4294901760
      %312 = vmatmul.f32.gmra.mxu0 %v311
      %v313 = vpop.f32.mrf.mxu0
      %v314 = vadd.f32 %v247, %v313
      %v315 = vand.u32 %v177, 4294901760
      %316 = vmatmul.f32.gmra.mxu0 %v315
      %v317 = vpop.f32.mrf.mxu0
      %v318 = vadd.f32 %v255, %v317
      %v319 = vand.u32 %v180, 4294901760
      %320 = vmatmul.f32.gmra.mxu0 %v319
      %v321 = vpop.f32.mrf.mxu0
      %v322 = vadd.f32 %v263, %v321
      %323 = vdwg.mxu0
      %324 = vmatpush.msra.mxu0 0.0
      %325 = vmatpush.msra.mxu0 0.0
      %326 = vmatpush.msra.mxu0 0.0
      %327 = vmatpush.msra.mxu0 0.0
      %328 = vmatpush.msra.mxu0 0.0
      %329 = vmatpush.msra.mxu0 0.0
      %330 = vmatpush.msra.mxu0 0.0
      %331 = vmatpush.msra.mxu0 0.0
      %332 = vmatpush.msra.mxu0 0.0
      %333 = vmatpush.msra.mxu0 0.0
      %334 = vmatpush.msra.mxu0 0.0
      %335 = vmatpush.msra.mxu0 0.0
      %336 = vmatpush.msra.mxu0 0.0
      %337 = vmatpush.msra.mxu0 0.0
      %v338 = vand.u32 %v156, 4294901760
      %v339 = vsub.f32 %v156, %v338
      %340 = vmatpush.msra.mxu0 %v339
      %v341 = vand.u32 %v155, 4294901760
      %v342 = vsub.f32 %v155, %v341
      %343 = vmatpush.msra.mxu0 %v342
      %v344 = vand.u32 %v159, 4294901760
      %v345 = vsub.f32 %v159, %v344
      %346 = vmatmul.f32.gmra.mxu0 %v345
      %v347 = vpop.f32.mrf.mxu0
      %v348 = vadd.f32 %v294, %v347
      %v349 = vand.u32 %v162, 4294901760
      %v350 = vsub.f32 %v162, %v349
      %351 = vmatmul.f32.gmra.mxu0 %v350
      %v352 = vpop.f32.mrf.mxu0
      %v353 = vadd.f32 %v298, %v352
      %v354 = vand.u32 %v165, 4294901760
      %v355 = vsub.f32 %v165, %v354
      %356 = vmatmul.f32.gmra.mxu0 %v355
      %v357 = vpop.f32.mrf.mxu0
      %v358 = vadd.f32 %v302, %v357
      %v359 = vand.u32 %v168, 4294901760
      %v360 = vsub.f32 %v168, %v359
      %361 = vmatmul.f32.gmra.mxu0 %v360
      %v362 = vpop.f32.mrf.mxu0
      %v363 = vadd.f32 %v306, %v362
      %v364 = vand.u32 %v171, 4294901760
      %v365 = vsub.f32 %v171, %v364
      %366 = vmatmul.f32.gmra.mxu0 %v365
      %v367 = vpop.f32.mrf.mxu0
      %v368 = vadd.f32 %v310, %v367
      %v369 = vand.u32 %v174, 4294901760
      %v370 = vsub.f32 %v174, %v369
      %371 = vmatmul.f32.gmra.mxu0 %v370
      %v372 = vpop.f32.mrf.mxu0
      %v373 = vadd.f32 %v314, %v372
      %v374 = vand.u32 %v177, 4294901760
      %v375 = vsub.f32 %v177, %v374
      %376 = vmatmul.f32.gmra.mxu0 %v375
      %v377 = vpop.f32.mrf.mxu0
      %v378 = vadd.f32 %v318, %v377
      %v379 = vand.u32 %v180, 4294901760
      %v380 = vsub.f32 %v180, %v379
      %381 = vmatmul.f32.gmra.mxu0 %v380
      %v382 = vpop.f32.mrf.mxu0
      %v383 = vadd.f32 %v322, %v382
      %384 = vdwg.mxu0
      %385 = vmatpush.msra.mxu0 0.0
      %386 = vmatpush.msra.mxu0 0.0
      %387 = vmatpush.msra.mxu0 0.0
      %388 = vmatpush.msra.mxu0 0.0
      %389 = vmatpush.msra.mxu0 0.0
      %390 = vmatpush.msra.mxu0 0.0
      %391 = vmatpush.msra.mxu0 0.0
      %392 = vmatpush.msra.mxu0 0.0
      %393 = vmatpush.msra.mxu0 0.0
      %394 = vmatpush.msra.mxu0 0.0
      %395 = vmatpush.msra.mxu0 0.0
      %396 = vmatpush.msra.mxu0 0.0
      %397 = vmatpush.msra.mxu0 0.0
      %398 = vmatpush.msra.mxu0 0.0
      %v399 = vand.u32 %v156, 4294901760
      %400 = vmatpush.msra.mxu0 %v399
      %v401 = vand.u32 %v155, 4294901760
      %402 = vmatpush.msra.mxu0 %v401
      %v403 = vand.u32 %v159, 4294901760
      %v404 = vsub.f32 %v159, %v403
      %v405 = vand.u32 %v404, 4294901760
      %406 = vmatmul.f32.gmra.mxu0 %v405
      %v407 = vpop.f32.mrf.mxu0
      %v408 = vadd.f32 %v348, %v407
      %v409 = vand.u32 %v162, 4294901760
      %v410 = vsub.f32 %v162, %v409
      %v411 = vand.u32 %v410, 4294901760
      %412 = vmatmul.f32.gmra.mxu0 %v411
      %v413 = vpop.f32.mrf.mxu0
      %v414 = vadd.f32 %v353, %v413
      %v415 = vand.u32 %v165, 4294901760
      %v416 = vsub.f32 %v165, %v415
      %v417 = vand.u32 %v416, 4294901760
      %418 = vmatmul.f32.gmra.mxu0 %v417
      %v419 = vpop.f32.mrf.mxu0
      %v420 = vadd.f32 %v358, %v419
      %v421 = vand.u32 %v168, 4294901760
      %v422 = vsub.f32 %v168, %v421
      %v423 = vand.u32 %v422, 4294901760
      %424 = vmatmul.f32.gmra.mxu0 %v423
      %v425 = vpop.f32.mrf.mxu0
      %v426 = vadd.f32 %v363, %v425
      %v427 = vand.u32 %v171, 4294901760
      %v428 = vsub.f32 %v171, %v427
      %v429 = vand.u32 %v428, 4294901760
      %430 = vmatmul.f32.gmra.mxu0 %v429
      %v431 = vpop.f32.mrf.mxu0
      %v432 = vadd.f32 %v368, %v431
      %v433 = vand.u32 %v174, 4294901760
      %v434 = vsub.f32 %v174, %v433
      %v435 = vand.u32 %v434, 4294901760
      %436 = vmatmul.f32.gmra.mxu0 %v435
      %v437 = vpop.f32.mrf.mxu0
      %v438 = vadd.f32 %v373, %v437
      %v439 = vand.u32 %v177, 4294901760
      %v440 = vsub.f32 %v177, %v439
      %v441 = vand.u32 %v440, 4294901760
      %442 = vmatmul.f32.gmra.mxu0 %v441
      %v443 = vpop.f32.mrf.mxu0
      %v444 = vadd.f32 %v378, %v443
      %v445 = vand.u32 %v180, 4294901760
      %v446 = vsub.f32 %v180, %v445
      %v447 = vand.u32 %v446, 4294901760
      %448 = vmatmul.f32.gmra.mxu0 %v447
      %v449 = vpop.f32.mrf.mxu0
      %v450 = vadd.f32 %v383, %v449
      %451 = vdwg.mxu0
      %452 = vmatpush.msra.mxu0 0.0
      %453 = vmatpush.msra.mxu0 0.0
      %454 = vmatpush.msra.mxu0 0.0
      %455 = vmatpush.msra.mxu0 0.0
      %456 = vmatpush.msra.mxu0 0.0
      %457 = vmatpush.msra.mxu0 0.0
      %458 = vmatpush.msra.mxu0 0.0
      %459 = vmatpush.msra.mxu0 0.0
      %460 = vmatpush.msra.mxu0 0.0
      %461 = vmatpush.msra.mxu0 0.0
      %462 = vmatpush.msra.mxu0 0.0
      %463 = vmatpush.msra.mxu0 0.0
      %464 = vmatpush.msra.mxu0 0.0
      %465 = vmatpush.msra.mxu0 0.0
      %v466 = vand.u32 %v156, 4294901760
      %v467 = vsub.f32 %v156, %v466
      %v468 = vand.u32 %v467, 4294901760
      %469 = vmatpush.msra.mxu0 %v468
      %v470 = vand.u32 %v155, 4294901760
      %v471 = vsub.f32 %v155, %v470
      %v472 = vand.u32 %v471, 4294901760
      %473 = vmatpush.msra.mxu0 %v472
      %v474 = vand.u32 %v159, 4294901760
      %475 = vmatmul.f32.gmra.mxu0 %v474
      %v476 = vpop.f32.mrf.mxu0
      %v477 = vadd.f32 %v408, %v476
      %v478 = vand.u32 %v162, 4294901760
      %479 = vmatmul.f32.gmra.mxu0 %v478
      %v480 = vpop.f32.mrf.mxu0
      %v481 = vadd.f32 %v414, %v480
      %v482 = vand.u32 %v165, 4294901760
      %483 = vmatmul.f32.gmra.mxu0 %v482
      %v484 = vpop.f32.mrf.mxu0
      %v485 = vadd.f32 %v420, %v484
      %v486 = vand.u32 %v168, 4294901760
      %487 = vmatmul.f32.gmra.mxu0 %v486
      %v488 = vpop.f32.mrf.mxu0
      %v489 = vadd.f32 %v426, %v488
      %v490 = vand.u32 %v171, 4294901760
      %491 = vmatmul.f32.gmra.mxu0 %v490
      %v492 = vpop.f32.mrf.mxu0
      %v493 = vadd.f32 %v432, %v492
      %v494 = vand.u32 %v174, 4294901760
      %495 = vmatmul.f32.gmra.mxu0 %v494
      %v496 = vpop.f32.mrf.mxu0
      %v497 = vadd.f32 %v438, %v496
      %v498 = vand.u32 %v177, 4294901760
      %499 = vmatmul.f32.gmra.mxu0 %v498
      %v500 = vpop.f32.mrf.mxu0
      %v501 = vadd.f32 %v444, %v500
      %v502 = vand.u32 %v180, 4294901760
      %503 = vmatmul.f32.gmra.mxu0 %v502
      %v504 = vpop.f32.mrf.mxu0
      %v505 = vadd.f32 %v450, %v504
      %506 = vdwg.mxu0
      %507 = vmatpush.msra.mxu0 0.0
      %508 = vmatpush.msra.mxu0 0.0
      %509 = vmatpush.msra.mxu0 0.0
      %510 = vmatpush.msra.mxu0 0.0
      %511 = vmatpush.msra.mxu0 0.0
      %512 = vmatpush.msra.mxu0 0.0
      %513 = vmatpush.msra.mxu0 0.0
      %514 = vmatpush.msra.mxu0 0.0
      %515 = vmatpush.msra.mxu0 0.0
      %516 = vmatpush.msra.mxu0 0.0
      %517 = vmatpush.msra.mxu0 0.0
      %518 = vmatpush.msra.mxu0 0.0
      %519 = vmatpush.msra.mxu0 0.0
      %520 = vmatpush.msra.mxu0 0.0
      %v521 = vand.u32 %v156, 4294901760
      %522 = vmatpush.msra.mxu0 %v521
      %v523 = vand.u32 %v155, 4294901760
      %524 = vmatpush.msra.mxu0 %v523
      %v525 = vand.u32 %v159, 4294901760
      %526 = vmatmul.f32.gmra.mxu0 %v525
      %v527 = vpop.f32.mrf.mxu0
      %v528 = vadd.f32 %v477, %v527
      %v529 = vand.u32 %v162, 4294901760
      %530 = vmatmul.f32.gmra.mxu0 %v529
      %v531 = vpop.f32.mrf.mxu0
      %v532 = vadd.f32 %v481, %v531
      %v533 = vand.u32 %v165, 4294901760
      %534 = vmatmul.f32.gmra.mxu0 %v533
      %v535 = vpop.f32.mrf.mxu0
      %v536 = vadd.f32 %v485, %v535
      %v537 = vand.u32 %v168, 4294901760
      %538 = vmatmul.f32.gmra.mxu0 %v537
      %v539 = vpop.f32.mrf.mxu0
      %v540 = vadd.f32 %v489, %v539
      %v541 = vand.u32 %v171, 4294901760
      %542 = vmatmul.f32.gmra.mxu0 %v541
      %v543 = vpop.f32.mrf.mxu0
      %v544 = vadd.f32 %v493, %v543
      %v545 = vand.u32 %v174, 4294901760
      %546 = vmatmul.f32.gmra.mxu0 %v545
      %v547 = vpop.f32.mrf.mxu0
      %v548 = vadd.f32 %v497, %v547
      %v549 = vand.u32 %v177, 4294901760
      %550 = vmatmul.f32.gmra.mxu0 %v549
      %v551 = vpop.f32.mrf.mxu0
      %v552 = vadd.f32 %v501, %v551
      %v553 = vand.u32 %v180, 4294901760
      %554 = vmatmul.f32.gmra.mxu0 %v553
      %v555 = vpop.f32.mrf.mxu0
      %v556 = vadd.f32 %v505, %v555
      %557 = vdwg.mxu0
      %vm558 = vcmask 523264
      %559 = vst.msk [vmem:[%s145] sm:$0xff] %vm558, %v528
      %560 = vst.msk [vmem:[%s145 + $0x8] sm:$0xff] %vm558, %v532
      %561 = vst.msk [vmem:[%s145 + $0x10] sm:$0xff] %vm558, %v536
      %562 = vst.msk [vmem:[%s145 + $0x18] sm:$0xff] %vm558, %v540
      %563 = vst.msk [vmem:[%s145 + $0x20] sm:$0xff] %vm558, %v544
      %564 = vst.msk [vmem:[%s145 + $0x28] sm:$0xff] %vm558, %v548
      %565 = vst.msk [vmem:[%s145 + $0x30] sm:$0xff] %vm558, %v552
      %566 = vst.msk [vmem:[%s145 + $0x38] sm:$0xff] %vm558, %v556
      %s567 = smul.u32 8, %s13
      %p568 = scmp.lt.s32.totalorder %s567, 15
      %s569 = scalar_select %p568, %s567, 15
      %s570 = smul.addr %s569, 8
      %s571 = scalar_lea.vmem %s2, %s570
      // Predicated region
      $region29: #{tpu_custom_call.1} parent=27 // pred_check
        %p572 = pneg %p78
      $region30: #{tpu_custom_call.1} parent=27 // pred_check_branch
        %574 = sbr.rel (%p572) target = $region32
      $region31: #{tpu_custom_call.1} parent=27 // pred_region
        %s575 = smul.u32 8, %s13
      $region32: #{tpu_custom_call.1} parent=27 // pred_fallthru
        _
    $region28: #{tpu_custom_call.1} parent=5 // pred_fallthru
      _
    %p576 = scmp.le.s32.totalorder 2, %s8
    // Predicated region
    $region33: #{tpu_custom_call.1} parent=5 // pred_check
      %p577 = pneg %p576
    $region34: #{tpu_custom_call.1} parent=5 // pred_check_branch
      %579 = sbr.rel (%p577) target = $region36
    $region35: #{tpu_custom_call.1} parent=5 // pred_region
      %s580 = ssub.s32 %s8, 2
      // Predicated region
      $region37: #{tpu_custom_call.1} parent=35 // pred_check
        %p581 = pneg %p84
      $region38: #{tpu_custom_call.1} parent=35 // pred_check_branch
        %583 = sbr.rel (%p581) target = $region40
      $region39: #{tpu_custom_call.1} parent=35 // pred_region
        %s584 = smul.u32 8, %s14
        %p585 = scmp.lt.s32.totalorder %s584, 15
        %s586 = scalar_select %p585, %s584, 15
        %s587 = smul.addr %s586, 8
        %s588 = scalar_lea.vmem %s2, %s587
      $region40: #{tpu_custom_call.1} parent=35 // pred_fallthru
        _
    $region36: #{tpu_custom_call.1} parent=5 // pred_fallthru
      _
  $region6: #{tpu_custom_call.1} parent=0 // loop_footer
    %s12 = sadd.s32 1, %s8
  $region7: #{tpu_custom_call.1} parent=0 // loop_footer_branch
    %7 = sbr.rel target = $region3
  $region8: #{tpu_custom_call.1} parent=0 // loop_exit
    _

</llo_original>
